<compile_context>
chip_gen: v5e
topology: v5e:2x2
jax: 0.10.0
libtpu: 0.0.40
codegen_flags: <defaults>
</compile_context>

<pallas_src>
import functools

import jax
import jax.numpy as jnp
from jax.experimental import pallas as pl
from jax.experimental.pallas import tpu as pltpu


def _series_decomp_kernel(w_ref, b_ref, x_ref, res_ref, mean_ref, *, kernel_sizes):
    # w_ref, b_ref : (K,) f32 in SMEM   (torch.nn.Linear(1, K) weight / bias)
    # x_ref        : (1, L, C) block in VMEM
    # res_ref, mean_ref : (1, L, C) output blocks in VMEM
    x = x_ref[...].astype(jnp.float32)            # (1, L, C)
    _, L, C = x.shape
    K = len(kernel_sizes)

    fronts = [(k - 1) - (k - 1) // 2 for k in kernel_sizes]
    ends = [(k - 1) // 2 for k in kernel_sizes]
    max_front = max(fronts)
    max_end = max(ends)

    # Replicate-padded copy of x along time (computed once, shared by all k):
    #   xpad[:, max_front + t, :] == x[:, clip(t, 0, L-1), :]   for the
    #   extended index range [-max_front, L-1+max_end].
    parts = []
    if max_front > 0:
        parts.append(jnp.broadcast_to(x[:, 0:1, :], (1, max_front, C)))
    parts.append(x)
    if max_end > 0:
        parts.append(jnp.broadcast_to(x[:, L - 1:L, :], (1, max_end, C)))
    xpad = jnp.concatenate(parts, axis=1) if len(parts) > 1 else x

    # Edge-clamped shifted views: shifted[d][:, t, :] == x[:, clip(t+d,0,L-1), :]
    shifted = {}
    for d in range(-max_front, max_end + 1):
        s = max_front + d
        shifted[d] = xpad[:, s:s + L, :]

    # Per-kernel-size moving averages (replicate pad + stride-1 AvgPool1d).
    mov_avgs = []
    for k, fr, en in zip(kernel_sizes, fronts, ends):
        acc = shifted[-fr]
        for d in range(-fr + 1, en + 1):
            acc = acc + shifted[d]
        mov_avgs.append(acc * (1.0 / k))

    # softmax_k(x * w_k + b_k), unrolled over the small static K.
    logits = [x * w_ref[i] + b_ref[i] for i in range(K)]
    m = logits[0]
    for lg in logits[1:]:
        m = jnp.maximum(m, lg)
    exps = [jnp.exp(lg - m) for lg in logits]
    denom = exps[0]
    for e in exps[1:]:
        denom = denom + e

    num = exps[0] * mov_avgs[0]
    for e, ma in zip(exps[1:], mov_avgs[1:]):
        num = num + e * ma
    moving_mean = num / denom

    # Single full-width (lane-dense) store per output.
    mean_ref[...] = moving_mean.astype(mean_ref.dtype)
    res_ref[...] = (x - moving_mean).astype(res_ref.dtype)


def series_decomp_multi(x, weight, bias, kernel_sizes):
    """Pallas TPU forward of series_decomp_multi(kernel_sizes).

    x       : (B, L, C) time series.
    weight  : (K, 1) or (K,)  -- torch.nn.Linear(1, K).weight
    bias    : (K,)            -- torch.nn.Linear(1, K).bias
    returns : (res, moving_mean), each (B, L, C), dtype of x.
    """
    kernel_sizes = tuple(int(k) for k in kernel_sizes)
    K = len(kernel_sizes)
    assert K >= 1
    B, L, C = x.shape
    for k in kernel_sizes:
        assert k >= 1
        assert (k - 1) - (k - 1) // 2 < L, "kernel size too large for sequence length"

    w = jnp.asarray(weight, dtype=jnp.float32).reshape(K)
    b = jnp.asarray(bias, dtype=jnp.float32).reshape(K)

    kernel = functools.partial(_series_decomp_kernel, kernel_sizes=kernel_sizes)

    cost = pl.CostEstimate(
        flops=int(B * L * C * (sum(kernel_sizes) + 8 * K + 2)),
        transcendentals=int(B * L * C * K),
        bytes_accessed=int(3 * B * L * C * x.dtype.itemsize + 8 * K),
    )

    res, mean = pl.pallas_call(
        kernel,
        out_shape=(
            jax.ShapeDtypeStruct((B, L, C), x.dtype),
            jax.ShapeDtypeStruct((B, L, C), x.dtype),
        ),
        grid=(B,),
        in_specs=[
            pl.BlockSpec(memory_space=pltpu.MemorySpace.SMEM),   # Linear weight (K,)
            pl.BlockSpec(memory_space=pltpu.MemorySpace.SMEM),   # Linear bias   (K,)
            pl.BlockSpec((1, L, C), lambda i: (i, 0, 0)),        # x
        ],
        out_specs=(
            pl.BlockSpec((1, L, C), lambda i: (i, 0, 0)),        # res
            pl.BlockSpec((1, L, C), lambda i: (i, 0, 0)),        # moving_mean
        ),
        compiler_params=pltpu.CompilerParams(
            dimension_semantics=("parallel",),
        ),
        cost_estimate=cost,
    )(w, b, x)
    return res, mean


def _reference(x, weight, bias, kernel_sizes):
    """Pure-JAX reference matching the PyTorch module exactly."""
    B, L, C = x.shape
    K = len(kernel_sizes)
    xf = x.astype(jnp.float32)
    mas = []
    for k in kernel_sizes:
        front = (k - 1) - (k - 1) // 2
        end = (k - 1) // 2
        xpad = jnp.concatenate(
            [jnp.repeat(xf[:, :1, :], front, axis=1),
             xf,
             jnp.repeat(xf[:, -1:, :], end, axis=1)],
            axis=1)                                               # (B, L+k-1, C)
        ma = jnp.stack([jnp.mean(xpad[:, t:t + k, :], axis=1) for t in range(L)],
                       axis=1)                                    # (B, L, C)
        mas.append(ma)
    mm = jnp.stack(mas, axis=-1)                                  # (B, L, C, K)
    w = jnp.asarray(weight, jnp.float32).reshape(K)
    b = jnp.asarray(bias, jnp.float32).reshape(K)
    logits = xf[..., None] * w + b                                # (B, L, C, K)
    wts = jax.nn.softmax(logits, axis=-1)
    moving_mean = jnp.sum(mm * wts, axis=-1)
    return xf - moving_mean, moving_mean


if __name__ == "__main__":
    B, L, C = 2, 16, 8
    kernel_sizes = (3, 5)
    K = len(kernel_sizes)

    key = jax.random.PRNGKey(0)
    kx, kw, kb = jax.random.split(key, 3)
    x = jax.random.normal(kx, (B, L, C), dtype=jnp.float32)
    weight = jax.random.normal(kw, (K, 1), dtype=jnp.float32) * 0.5   # Linear(1, K).weight
    bias = jax.random.normal(kb, (K,), dtype=jnp.float32) * 0.5       # Linear(1, K).bias

    res, mean = series_decomp_multi(x, weight, bias, kernel_sizes)
    res, mean = jax.block_until_ready((res, mean))

    res_ref, mean_ref = _reference(x, weight, bias, kernel_sizes)
    assert res.shape == (B, L, C) and mean.shape == (B, L, C)
    assert jnp.allclose(mean, mean_ref, atol=1e-5, rtol=1e-5)
    assert jnp.allclose(res, res_ref, atol=1e-5, rtol=1e-5)

    print("KERNEL_OK")
</pallas_src>

<mosaic_0001>
module attributes {stable_mosaic.version = 11 : i64} {
  func.func @_series_decomp_kernel(%arg0: i32, %arg1: memref<2xf32, #tpu.memory_space<smem>>, %arg2: memref<2xf32, #tpu.memory_space<smem>>, %arg3: memref<1x16x8xf32, #tpu.memory_space<vmem>>, %arg4: memref<1x16x8xf32, #tpu.memory_space<vmem>>, %arg5: memref<1x16x8xf32, #tpu.memory_space<vmem>>) attributes {dimension_semantics = [#tpu.dimension_semantics<parallel>], iteration_bounds = array<i64: 2>, scalar_prefetch = 0 : i64, scratch_operands = 0 : i64, tpu.core_type = #tpu.core_type<tc>, window_params = [{transform_indices = @transform_0, window_bounds = array<i64: 2>}, {transform_indices = @transform_1, window_bounds = array<i64: 2>}, {transform_indices = @transform_2, window_bounds = array<i64: 1, 16, 8>}, {transform_indices = @transform_3, window_bounds = array<i64: 1, 16, 8>}, {transform_indices = @transform_4, window_bounds = array<i64: 1, 16, 8>}]} {
    %c0 = arith.constant 0 : index
    %c0_0 = arith.constant 0 : index
    %c0_1 = arith.constant 0 : index
    %0 = vector.load %arg3[%c0, %c0_0, %c0_1] : memref<1x16x8xf32, #tpu.memory_space<vmem>>, vector<1x16x8xf32>
    %1 = vector.extract_strided_slice %0 {offsets = [0, 0, 0], sizes = [1, 1, 8], strides = [1, 1, 1]} : vector<1x16x8xf32> to vector<1x1x8xf32>
    %2 = vector.shape_cast %1 : vector<1x1x8xf32> to vector<1x1x8xf32>
    %3 = vector.broadcast %2 : vector<1x1x8xf32> to vector<1x2x8xf32>
    %4 = vector.extract_strided_slice %0 {offsets = [0, 15, 0], sizes = [1, 1, 8], strides = [1, 1, 1]} : vector<1x16x8xf32> to vector<1x1x8xf32>
    %5 = vector.shape_cast %4 : vector<1x1x8xf32> to vector<1x1x8xf32>
    %6 = vector.broadcast %5 : vector<1x1x8xf32> to vector<1x2x8xf32>
    %7 = tpu.concatenate %3, %0, %6 in 1 : vector<1x2x8xf32>, vector<1x16x8xf32>, vector<1x2x8xf32> -> vector<1x20x8xf32>
    %8 = vector.extract_strided_slice %7 {offsets = [0, 0, 0], sizes = [1, 16, 8], strides = [1, 1, 1]} : vector<1x20x8xf32> to vector<1x16x8xf32>
    %9 = vector.extract_strided_slice %7 {offsets = [0, 1, 0], sizes = [1, 16, 8], strides = [1, 1, 1]} : vector<1x20x8xf32> to vector<1x16x8xf32>
    %10 = vector.extract_strided_slice %7 {offsets = [0, 2, 0], sizes = [1, 16, 8], strides = [1, 1, 1]} : vector<1x20x8xf32> to vector<1x16x8xf32>
    %11 = vector.extract_strided_slice %7 {offsets = [0, 3, 0], sizes = [1, 16, 8], strides = [1, 1, 1]} : vector<1x20x8xf32> to vector<1x16x8xf32>
    %12 = vector.extract_strided_slice %7 {offsets = [0, 4, 0], sizes = [1, 16, 8], strides = [1, 1, 1]} : vector<1x20x8xf32> to vector<1x16x8xf32>
    %13 = arith.addf %9, %10 : vector<1x16x8xf32>
    %14 = arith.addf %13, %11 : vector<1x16x8xf32>
    %cst = arith.constant 0.333333343 : f32
    %15 = vector.broadcast %cst : f32 to vector<1x16x8xf32>
    %16 = arith.mulf %14, %15 : vector<1x16x8xf32>
    %17 = arith.addf %8, %9 : vector<1x16x8xf32>
    %18 = arith.addf %17, %10 : vector<1x16x8xf32>
    %19 = arith.addf %18, %11 : vector<1x16x8xf32>
    %20 = arith.addf %19, %12 : vector<1x16x8xf32>
    %cst_2 = arith.constant 2.000000e-01 : f32
    %21 = vector.broadcast %cst_2 : f32 to vector<1x16x8xf32>
    %22 = arith.mulf %20, %21 : vector<1x16x8xf32>
    %c0_3 = arith.constant 0 : index
    %23 = memref.load %arg1[%c0_3] : memref<2xf32, #tpu.memory_space<smem>>
    %24 = vector.broadcast %23 : f32 to vector<1x16x8xf32>
    %25 = arith.mulf %0, %24 : vector<1x16x8xf32>
    %c0_4 = arith.constant 0 : index
    %26 = memref.load %arg2[%c0_4] : memref<2xf32, #tpu.memory_space<smem>>
    %27 = vector.broadcast %26 : f32 to vector<1x16x8xf32>
    %28 = arith.addf %25, %27 : vector<1x16x8xf32>
    %c1 = arith.constant 1 : index
    %29 = memref.load %arg1[%c1] : memref<2xf32, #tpu.memory_space<smem>>
    %30 = vector.broadcast %29 : f32 to vector<1x16x8xf32>
    %31 = arith.mulf %0, %30 : vector<1x16x8xf32>
    %c1_5 = arith.constant 1 : index
    %32 = memref.load %arg2[%c1_5] : memref<2xf32, #tpu.memory_space<smem>>
    %33 = vector.broadcast %32 : f32 to vector<1x16x8xf32>
    %34 = arith.addf %31, %33 : vector<1x16x8xf32>
    %35 = arith.maximumf %28, %34 : vector<1x16x8xf32>
    %36 = arith.subf %28, %35 : vector<1x16x8xf32>
    %37 = math.exp %36 : vector<1x16x8xf32>
    %38 = arith.subf %34, %35 : vector<1x16x8xf32>
    %39 = math.exp %38 : vector<1x16x8xf32>
    %40 = arith.addf %37, %39 : vector<1x16x8xf32>
    %41 = arith.mulf %37, %16 : vector<1x16x8xf32>
    %42 = arith.mulf %39, %22 : vector<1x16x8xf32>
    %43 = arith.addf %41, %42 : vector<1x16x8xf32>
    %44 = arith.divf %43, %40 : vector<1x16x8xf32>
    %c0_6 = arith.constant 0 : index
    %c0_7 = arith.constant 0 : index
    %c0_8 = arith.constant 0 : index
    %45 = vector.load %arg5[%c0_6, %c0_7, %c0_8] : memref<1x16x8xf32, #tpu.memory_space<vmem>>, vector<1x16x8xf32>
    tpu.vector_store %arg5[%c0_6, %c0_7, %c0_8], %44 {strides = array<i32>} : memref<1x16x8xf32, #tpu.memory_space<vmem>>, vector<1x16x8xf32>,
    %46 = arith.subf %0, %44 : vector<1x16x8xf32>
    %c0_9 = arith.constant 0 : index
    %c0_10 = arith.constant 0 : index
    %c0_11 = arith.constant 0 : index
    %47 = vector.load %arg4[%c0_9, %c0_10, %c0_11] : memref<1x16x8xf32, #tpu.memory_space<vmem>>, vector<1x16x8xf32>
    tpu.vector_store %arg4[%c0_9, %c0_10, %c0_11], %46 {strides = array<i32>} : memref<1x16x8xf32, #tpu.memory_space<vmem>>, vector<1x16x8xf32>,
    return
  }
  func.func @transform_0(%arg0: i32) -> i32 {
    %c0_i32 = arith.constant 0 : i32
    %c0_i32_0 = arith.constant 0 : i32
    return %c0_i32 : i32
  }
  func.func @transform_1(%arg0: i32) -> i32 {
    %c0_i32 = arith.constant 0 : i32
    %c0_i32_0 = arith.constant 0 : i32
    return %c0_i32 : i32
  }
  func.func @transform_2(%arg0: i32) -> (i32, i32, i32) {
    %c0_i32 = arith.constant 0 : i32
    %c0_i32_0 = arith.constant 0 : i32
    %c0_i32_1 = arith.constant 0 : i32
    return %arg0, %c0_i32, %c0_i32_0 : i32, i32, i32
  }
  func.func @transform_3(%arg0: i32) -> (i32, i32, i32) {
    %c0_i32 = arith.constant 0 : i32
    %c0_i32_0 = arith.constant 0 : i32
    %c0_i32_1 = arith.constant 0 : i32
    return %arg0, %c0_i32, %c0_i32_0 : i32, i32, i32
  }
  func.func @transform_4(%arg0: i32) -> (i32, i32, i32) {
    %c0_i32 = arith.constant 0 : i32
    %c0_i32_0 = arith.constant 0 : i32
    %c0_i32_1 = arith.constant 0 : i32
    return %arg0, %c0_i32, %c0_i32_0 : i32, i32, i32
  }
}

</mosaic_0001>

<llo_original>
// kernel: tpu_custom_call.1
$region0: #{tpu_custom_call.1}
  #allocation0 [shape = 'u32[]', space=smem, size = 0x4, offset = 0x4, fixed_abs, tag = 'smem constant byte address 0x4 - core index']
  #allocation1 [shape = 'u32[72,128]{1,0:T(1,128)}', space=vmem, size = 0x9000, scoped, tag = 'internal scratch']
  %s0 = inlined_call_operand.vmem [shape: f32[2], index: 0, kind: input, shape index: {}]
  %s1 = inlined_call_operand.vmem [shape: f32[2], index: 1, kind: input, shape index: {}]
  %s2 = inlined_call_operand.vmem [shape: f32[2,16,8], index: 2, kind: input, shape index: {}]
  %s3 = inlined_call_operand.vmem [shape: f32[2,16,8], index: 3, kind: output, shape index: {0}]
  %s4 = inlined_call_operand.vmem [shape: f32[2,16,8], index: 4, kind: output, shape index: {1}]
  %5 = xla_tuple %s3, %s4
  %s6 = sld [smem:[#allocation0]]
  $region61: #{tpu_custom_call.1} parent=0
    _
  %s8 = ssub.s32 1, %s6
  %s9 = scalar_select 0, %s8, %s6
  $region1: #{tpu_custom_call.1} parent=0
    #allocation2 [shape = 'u8[512]{0}', space=smem, size = 0x200, scoped, tag = 'input window, operand 0, single buffered']
    #allocation3 [shape = 's32[2]{0}', space=sflag, size = 0x8, scoped, tag = 'scoped memory for tpu_custom_call.1']
    #allocation4 [shape = 'u8[512]{0}', space=smem, size = 0x200, scoped, tag = 'input window, operand 1, single buffered']
    #allocation5 [shape = 's32[1]{0}', space=sflag, size = 0x4, scoped, tag = 'scoped memory for tpu_custom_call.1']
    %10 = vsyncpa [#allocation3], 0
    %11 = vsyncpa [#allocation5], 0
    loop: start=0, step=1, limit=4
    $region2: #{tpu_custom_call.1} parent=1 // loop_pre_header
      _
    $region3: #{tpu_custom_call.1} parent=1 // loop_header
      %s13 = sphi 0, %s17
      %p14 = scmp.ge.s32.totalorder %s13, 4
      %s21 = sphi 0, %s21
      %s23 = sphi 0, %s21
      %s24 = sphi 0, %s23
      %s38 = sphi 0, %s24
      %s42 = sphi 0, %s42
      %s44 = sphi 0, %s42
      %s45 = sphi 0, %s44
      %s59 = sphi 0, %s45
      %s65 = sphi 0, %s67
      %s68 = sphi 0, %s65
      %s69 = sphi 0, %s68
      %s85 = sphi 0, %s69
      %s91 = sphi 0, %s93
      %s94 = sphi 0, %s91
      %s95 = sphi 0, %s94
      %s111 = sphi 0, %s95
      %s117 = sphi 0, %s119
      %s120 = sphi 0, %s117
      %s121 = sphi 0, %s120
      %s137 = sphi 0, %s121
    $region4: #{tpu_custom_call.1} parent=1 // loop_header_branch
      %16 = sbr.rel (%p14) target = $region8
    $region5: #{tpu_custom_call.1} parent=1 // loop_body
      %s18 = ssub.s32 %s13, 1
      %s19 = ssub.s32 %s13, 2
      %s20 = sadd.s32 %s13, 1
      %s22 = sadd.s32 %s21, 1
      %p25 = scmp.eq.s32.totalorder %s13, 1
      %p26 = scmp.ne.s32.totalorder %s21, %s23
      %p27 = scmp.eq.s32.totalorder %s13, 0
      %p28 = por %p26, %p27
      %p29 = scmp.ne.s32.totalorder %s21, %s23
      %p30 = scmp.eq.s32.totalorder %s18, 1
      %p31 = por %p29, %p30
      %p32 = scmp.ne.s32.totalorder %s23, %s24
      %p33 = scmp.eq.s32.totalorder %s18, 0
      %p34 = por %p32, %p33
      %p35 = scmp.ne.s32.totalorder %s23, %s24
      %p36 = scmp.eq.s32.totalorder %s19, 1
      %p37 = por %p35, %p36
      %p39 = scmp.ne.s32.totalorder %s24, %s38
      %p40 = scmp.eq.s32.totalorder %s19, 0
      %p41 = por %p39, %p40
      %s43 = sadd.s32 %s42, 1
      %p46 = scmp.eq.s32.totalorder %s13, 1
      %p47 = scmp.ne.s32.totalorder %s42, %s44
      %p48 = scmp.eq.s32.totalorder %s13, 0
      %p49 = por %p47, %p48
      %p50 = scmp.ne.s32.totalorder %s42, %s44
      %p51 = scmp.eq.s32.totalorder %s18, 1
      %p52 = por %p50, %p51
      %p53 = scmp.ne.s32.totalorder %s44, %s45
      %p54 = scmp.eq.s32.totalorder %s18, 0
      %p55 = por %p53, %p54
      %p56 = scmp.ne.s32.totalorder %s44, %s45
      %p57 = scmp.eq.s32.totalorder %s19, 1
      %p58 = por %p56, %p57
      %p60 = scmp.ne.s32.totalorder %s45, %s59
      %p61 = scmp.eq.s32.totalorder %s19, 0
      %p62 = por %p60, %p61
      %s63 = ssub.s32 %s13, %s20
      %p64 = scmp.eq.s32.totalorder %s63, 0
      %s66 = sadd.s32 %s65, 1
      %s67 = scalar_select %p64, %s65, %s66
      %p70 = pneg %p64
      %p71 = scmp.eq.s32.totalorder %s13, 1
      %p72 = por %p70, %p71
      %p73 = scmp.ne.s32.totalorder %s65, %s68
      %p74 = scmp.eq.s32.totalorder %s13, 0
      %p75 = por %p73, %p74
      %p76 = scmp.ne.s32.totalorder %s65, %s68
      %p77 = scmp.eq.s32.totalorder %s18, 1
      %p78 = por %p76, %p77
      %p79 = scmp.ne.s32.totalorder %s68, %s69
      %p80 = scmp.eq.s32.totalorder %s18, 0
      %p81 = por %p79, %p80
      %p82 = scmp.ne.s32.totalorder %s68, %s69
      %p83 = scmp.eq.s32.totalorder %s19, 1
      %p84 = por %p82, %p83
      %p86 = scmp.ne.s32.totalorder %s69, %s85
      %p87 = scmp.eq.s32.totalorder %s19, 0
      %p88 = por %p86, %p87
      %s89 = ssub.s32 %s13, %s20
      %p90 = scmp.eq.s32.totalorder %s89, 0
      %s92 = sadd.s32 %s91, 1
      %s93 = scalar_select %p90, %s91, %s92
      %p96 = pneg %p90
      %p97 = scmp.eq.s32.totalorder %s13, 1
      %p98 = por %p96, %p97
      %p99 = scmp.ne.s32.totalorder %s91, %s94
      %p100 = scmp.eq.s32.totalorder %s13, 0
      %p101 = por %p99, %p100
      %p102 = scmp.ne.s32.totalorder %s91, %s94
      %p103 = scmp.eq.s32.totalorder %s18, 1
      %p104 = por %p102, %p103
      %p105 = scmp.ne.s32.totalorder %s94, %s95
      %p106 = scmp.eq.s32.totalorder %s18, 0
      %p107 = por %p105, %p106
      %p108 = scmp.ne.s32.totalorder %s94, %s95
      %p109 = scmp.eq.s32.totalorder %s19, 1
      %p110 = por %p108, %p109
      %p112 = scmp.ne.s32.totalorder %s95, %s111
      %p113 = scmp.eq.s32.totalorder %s19, 0
      %p114 = por %p112, %p113
      %s115 = ssub.s32 %s13, %s20
      %p116 = scmp.eq.s32.totalorder %s115, 0
      %s118 = sadd.s32 %s117, 1
      %s119 = scalar_select %p116, %s117, %s118
      %p122 = pneg %p116
      %p123 = scmp.eq.s32.totalorder %s13, 1
      %p124 = por %p122, %p123
      %p125 = scmp.ne.s32.totalorder %s117, %s120
      %p126 = scmp.eq.s32.totalorder %s13, 0
      %p127 = por %p125, %p126
      %p128 = scmp.ne.s32.totalorder %s117, %s120
      %p129 = scmp.eq.s32.totalorder %s18, 1
      %p130 = por %p128, %p129
      %p131 = scmp.ne.s32.totalorder %s120, %s121
      %p132 = scmp.eq.s32.totalorder %s18, 0
      %p133 = por %p131, %p132
      %p134 = scmp.ne.s32.totalorder %s120, %s121
      %p135 = scmp.eq.s32.totalorder %s19, 1
      %p136 = por %p134, %p135
      %p138 = scmp.ne.s32.totalorder %s121, %s137
      %p139 = scmp.eq.s32.totalorder %s19, 0
      %p140 = por %p138, %p139
      %p141 = scmp.le.s32.totalorder 1, %s13
      %p142 = scmp.lt.s32.totalorder %s13, 3
      %p143 = pnand %p141, %p142
      %p144 = pneg %p143
      // Predicated region
      $region9: #{tpu_custom_call.1} parent=5 // pred_check
        _
      $region10: #{tpu_custom_call.1} parent=5 // pred_check_branch
        %146 = sbr.rel (%p143) target = $region12
      $region11: #{tpu_custom_call.1} parent=5 // pred_region
        %s147 = ssub.s32 %s13, 1
        // Predicated region
        $region13: #{tpu_custom_call.1} parent=11 // pred_check
          %p148 = pneg %p34
        $region14: #{tpu_custom_call.1} parent=11 // pred_check_branch
          %150 = sbr.rel (%p148) target = $region16
        $region15: #{tpu_custom_call.1} parent=11 // pred_region
          %152 = vsyncadd [#allocation3], 0
          %s154 = sshll.u32 %s0, 4
          %s155 = int_to_ptr.vmem [resolvable:$true] %s154
          %157 = dma.vmem_to_smem %s155, 16, [#allocation2], [#allocation3]
        $region16: #{tpu_custom_call.1} parent=11 // pred_fallthru
          _
        // Predicated region
        $region17: #{tpu_custom_call.1} parent=11 // pred_check
          %p158 = pneg %p55
        $region18: #{tpu_custom_call.1} parent=11 // pred_check_branch
          %160 = sbr.rel (%p158) target = $region20
        $region19: #{tpu_custom_call.1} parent=11 // pred_region
          %162 = vsyncadd [#allocation5], 0
          %s164 = sshll.u32 %s1, 4
          %s165 = int_to_ptr.vmem [resolvable:$true] %s164
          %167 = dma.vmem_to_smem %s165, 16, [#allocation4], [#allocation5]
        $region20: #{tpu_custom_call.1} parent=11 // pred_fallthru
          _
      $region12: #{tpu_custom_call.1} parent=5 // pred_fallthru
        _
      %p168 = scmp.lt.s32.totalorder %s13, 2
      // Predicated region
      $region21: #{tpu_custom_call.1} parent=5 // pred_check
        %p169 = pneg %p168
      $region22: #{tpu_custom_call.1} parent=5 // pred_check_branch
        %171 = sbr.rel (%p169) target = $region24
      $region23: #{tpu_custom_call.1} parent=5 // pred_region
        // Predicated region
        $region25: #{tpu_custom_call.1} parent=23 // pred_check
          %p172 = pneg %p75
        $region26: #{tpu_custom_call.1} parent=23 // pred_check_branch
          %174 = sbr.rel (%p172) target = $region28
        $region27: #{tpu_custom_call.1} parent=23 // pred_region
          %p175 = scmp.lt.s32.totalorder %s13, 1
          %s176 = scalar_select %p175, %s13, 1
          %s177 = smul.addr %s176, 2
          %s178 = smul.addr %s177, 8
          %s179 = scalar_lea.vmem %s2, %s178
        $region28: #{tpu_custom_call.1} parent=23 // pred_fallthru
          _
      $region24: #{tpu_custom_call.1} parent=5 // pred_fallthru
        _
      %p180 = scmp.le.s32.totalorder 1, %s13
      %p181 = scmp.lt.s32.totalorder %s13, 3
      %p182 = pnand %p180, %p181
      %p183 = pneg %p182
      // Predicated region
      $region29: #{tpu_custom_call.1} parent=5 // pred_check
        _
      $region30: #{tpu_custom_call.1} parent=5 // pred_check_branch
        %185 = sbr.rel (%p182) target = $region32
      $region31: #{tpu_custom_call.1} parent=5 // pred_region
        %s186 = ssub.s32 %s13, 1
        // Predicated region
        $region33: #{tpu_custom_call.1} parent=31 // pred_check
          %p187 = pneg %p34
        $region34: #{tpu_custom_call.1} parent=31 // pred_check_branch
          %189 = sbr.rel (%p187) target = $region36
        $region35: #{tpu_custom_call.1} parent=31 // pred_region
          %191 = dma.done [#allocation3], 16
        $region36: #{tpu_custom_call.1} parent=31 // pred_fallthru
          _
        // Predicated region
        $region37: #{tpu_custom_call.1} parent=31 // pred_check
          %p192 = pneg %p55
        $region38: #{tpu_custom_call.1} parent=31 // pred_check_branch
          %194 = sbr.rel (%p192) target = $region40
        $region39: #{tpu_custom_call.1} parent=31 // pred_region
          %196 = dma.done [#allocation5], 16
        $region40: #{tpu_custom_call.1} parent=31 // pred_fallthru
          _
        %197 = sfence
        %p198 = pneg %p34
        %p199 = pneg %p31
        %p200 = pneg %p55
        %p201 = pneg %p52
        %p202 = scmp.lt.s32.totalorder %s18, 1
        %s203 = scalar_select %p202, %s18, 1
        %s204 = smul.addr %s203, 2
        %s205 = smul.addr %s204, 8
        %s206 = scalar_lea.vmem %s2, %s205
        %p207 = pneg %p81
        %p208 = pneg %p78
        %p209 = pneg %p107
        %p210 = pneg %p104
        %p211 = scmp.lt.s32.totalorder %s18, 1
        %s212 = scalar_select %p211, %s18, 1
        %s213 = smul.addr %s212, 2
        %s214 = smul.addr %s213, 8
        %s215 = scalar_lea.vmem %s3, %s214
        %p216 = pneg %p133
        %p217 = pneg %p130
        %p218 = scmp.lt.s32.totalorder %s18, 1
        %s219 = scalar_select %p218, %s18, 1
        %s220 = smul.addr %s219, 2
        %s221 = smul.addr %s220, 8
        %s222 = scalar_lea.vmem %s4, %s221
        %p223 = scmp.lt.s32.totalorder %s18, 1
        %s224 = scalar_select %p223, %s18, 1
        %s225 = smul.addr %s224, 2
        %s226 = smul.addr %s225, 8
        %s227 = scalar_lea.vmem %s2, %s226
        %p228 = scmp.lt.s32.totalorder %s18, 1
        %s229 = scalar_select %p228, %s18, 1
        %s230 = smul.addr %s229, 2
        %s231 = smul.addr %s230, 8
        %s232 = scalar_lea.vmem %s3, %s231
        %p233 = scmp.lt.s32.totalorder %s18, 1
        %s234 = scalar_select %p233, %s18, 1
        %s235 = smul.addr %s234, 2
        %s236 = smul.addr %s235, 8
        %s237 = scalar_lea.vmem %s4, %s236
        %v238 = vld [vmem:[%s227] sm:$0xff]
        %v239 = vld [vmem:[%s227 + $0x8] sm:$0xff]
        %v240 = vperm.slane %v238, 0
        %v241 = vperm.slane %v239, 7
        %vm244 = vcmask 1041408
        %v245 = vrot.slane %v238, 6
        %v246 = vrot.slane %v239, 6
        %v247 = vsel %vm244, %v245, %v246
        %v251 = vsel %vm244, %v240, %v245
        %v252 = vsel %vm244, %v246, %v241
        %vm255 = vcmask 1046528
        %v256 = vrot.slane %v251, 1
        %v257 = vrot.slane %v247, 1
        %v258 = vsel %vm255, %v256, %v257
        %v259 = vrot.slane %v252, 1
        %v260 = vsel %vm255, %v257, %v259
        %v264 = vadd.f32 %v251, %v258
        %v265 = vadd.f32 %v247, %v260
        %v266 = vadd.f32 %v252, %v259
        %vm267 = vcmask 1045504
        %v268 = vrot.slane %v251, 2
        %v269 = vrot.slane %v247, 2
        %v270 = vsel %vm267, %v268, %v269
        %v271 = vrot.slane %v252, 2
        %v272 = vsel %vm267, %v269, %v271
        %v276 = vadd.f32 %v264, %v270
        %v277 = vadd.f32 %v265, %v272
        %v278 = vadd.f32 %v266, %v271
        %v279 = vmul.f32 %v276, 0.33333334
        %v280 = vmul.f32 %v277, 0.33333334
        %v281 = vmul.f32 %v278, 0.33333334
        %vm282 = vcmask 1044480
        %v283 = vrot.slane %v251, 3
        %v284 = vrot.slane %v247, 3
        %v285 = vsel %vm282, %v283, %v284
        %v286 = vrot.slane %v252, 3
        %v287 = vsel %vm282, %v284, %v286
        %v290 = vadd.f32 %v276, %v285
        %v291 = vadd.f32 %v277, %v287
        %vm292 = vcmask 1043456
        %v293 = vrot.slane %v251, 4
        %v294 = vrot.slane %v247, 4
        %v295 = vsel %vm292, %v293, %v294
        %v296 = vrot.slane %v252, 4
        %v297 = vsel %vm292, %v294, %v296
        %v300 = vadd.f32 %v290, %v295
        %v301 = vadd.f32 %v291, %v297
        %v302 = vmul.f32 %v300, 0.2
        %v303 = vmul.f32 %v301, 0.2
        %s304 = sld [smem:[#allocation2]]
        %v305 = vstv %s304
        %v306 = vmul.f32 %v238, %v305
        %v307 = vmul.f32 %v239, %v305
        %s308 = sld [smem:[#allocation4]]
        %v309 = vstv %s308
        %v310 = vadd.f32 %v306, %v309
        %v311 = vadd.f32 %v307, %v309
        %s312 = sld [smem:[#allocation2 + $0x1]]
        %v313 = vstv %s312
        %v314 = vmul.f32 %v238, %v313
        %v315 = vmul.f32 %v239, %v313
        %s316 = sld [smem:[#allocation4 + $0x1]]
        %v317 = vstv %s316
        %v318 = vadd.f32 %v314, %v317
        %v319 = vadd.f32 %v315, %v317
        %v320 = vmax.f32 %v310, %v318
        %v321 = vmax.f32 %v311, %v319
        %v322 = vsub.f32 %v310, %v320
        %v323 = vsub.f32 %v311, %v321
        %v324 = vmul.f32 %v322, 1.442695
        %v325 = vpow.pop %v324
        %v326 = vmul.f32 %v323, 1.442695
        %v327 = vpow.pop %v326
        %v328 = vsub.f32 %v318, %v320
        %v329 = vsub.f32 %v319, %v321
        %v330 = vmul.f32 %v328, 1.442695
        %v331 = vpow.pop %v330
        %v332 = vmul.f32 %v329, 1.442695
        %v333 = vpow.pop %v332
        %v334 = vadd.f32 %v325, %v331
        %v335 = vadd.f32 %v327, %v333
        %v339 = vrot.slane %v279, 1
        %v340 = vrot.slane %v280, 1
        %v341 = vsel %vm255, %v339, %v340
        %v342 = vrot.slane %v281, 1
        %v343 = vsel %vm255, %v340, %v342
        %v346 = vmul.f32 %v325, %v341
        %v347 = vmul.f32 %v327, %v343
        %v348 = vmul.f32 %v331, %v302
        %v349 = vmul.f32 %v333, %v303
        %v350 = vadd.f32 %v346, %v348
        %v351 = vadd.f32 %v347, %v349
        %v352 = vrcp.pop %v334
        %v353 = vmul.f32 %v334, %v352
        %v354 = vsub.f32 1.0, %v353
        %v355 = vmul.f32 %v352, %v354
        %v356 = vadd.f32 %v352, %v355
        %vm357 = vweird.f32 %v334
        %vm358 = vweird.f32 %v352
        %vm359 = vmor %vm357, %vm358
        %v360 = vsel %vm359, %v352, %v356
        %v361 = vand.u32 2147483647, %v334
        %vm362 = vcmp.eq.f32.partialorder %v361, 8.507059e+37
        %v363 = vand.u32 %v334, 2147483648
        %v364 = vor.u32 1.1754944e-38, %v363
        %v365 = vsel %vm362, %v364, %v360
        %v366 = vmul.f32 %v350, %v365
        %v367 = vrcp.pop %v335
        %v368 = vmul.f32 %v335, %v367
        %v369 = vsub.f32 1.0, %v368
        %v370 = vmul.f32 %v367, %v369
        %v371 = vadd.f32 %v367, %v370
        %vm372 = vweird.f32 %v335
        %vm373 = vweird.f32 %v367
        %vm374 = vmor %vm372, %vm373
        %v375 = vsel %vm374, %v367, %v371
        %v376 = vand.u32 2147483647, %v335
        %vm377 = vcmp.eq.f32.partialorder %v376, 8.507059e+37
        %v378 = vand.u32 %v335, 2147483648
        %v379 = vor.u32 1.1754944e-38, %v378
        %v380 = vsel %vm377, %v379, %v375
        %v381 = vmul.f32 %v351, %v380
        %vm382 = vcmask 64512
        %383 = vst.msk [vmem:[%s237] sm:$0xff] %vm382, %v366
        %384 = vst.msk [vmem:[%s237 + $0x8] sm:$0xff] %vm382, %v381
        %v385 = vsub.f32 %v238, %v366
        %v386 = vsub.f32 %v239, %v381
        %387 = vst.msk [vmem:[%s232] sm:$0xff] %vm382, %v385
        %388 = vst.msk [vmem:[%s232 + $0x8] sm:$0xff] %vm382, %v386
        %p389 = scmp.lt.s32.totalorder %s18, 1
        %s390 = scalar_select %p389, %s18, 1
        %s391 = smul.addr %s390, 2
        %s392 = smul.addr %s391, 8
        %s393 = scalar_lea.vmem %s3, %s392
        %p394 = scmp.lt.s32.totalorder %s18, 1
        %s395 = scalar_select %p394, %s18, 1
        %s396 = smul.addr %s395, 2
        %s397 = smul.addr %s396, 8
        %s398 = scalar_lea.vmem %s4, %s397
        // Predicated region
        $region41: #{tpu_custom_call.1} parent=31 // pred_check
          %p399 = pneg %p104
        $region42: #{tpu_custom_call.1} parent=31 // pred_check_branch
          %401 = sbr.rel (%p399) target = $region44
        $region43: #{tpu_custom_call.1} parent=31 // pred_region
          _
        $region44: #{tpu_custom_call.1} parent=31 // pred_fallthru
          _
        // Predicated region
        $region45: #{tpu_custom_call.1} parent=31 // pred_check
          %p402 = pneg %p130
        $region46: #{tpu_custom_call.1} parent=31 // pred_check_branch
          %404 = sbr.rel (%p402) target = $region48
        $region47: #{tpu_custom_call.1} parent=31 // pred_region
          _
        $region48: #{tpu_custom_call.1} parent=31 // pred_fallthru
          _
      $region32: #{tpu_custom_call.1} parent=5 // pred_fallthru
        _
      %p405 = scmp.le.s32.totalorder 2, %s13
      // Predicated region
      $region49: #{tpu_custom_call.1} parent=5 // pred_check
        %p406 = pneg %p405
      $region50: #{tpu_custom_call.1} parent=5 // pred_check_branch
        %408 = sbr.rel (%p406) target = $region52
      $region51: #{tpu_custom_call.1} parent=5 // pred_region
        %s409 = ssub.s32 %s13, 2
        // Predicated region
        $region53: #{tpu_custom_call.1} parent=51 // pred_check
          %p410 = pneg %p110
        $region54: #{tpu_custom_call.1} parent=51 // pred_check_branch
          %412 = sbr.rel (%p410) target = $region56
        $region55: #{tpu_custom_call.1} parent=51 // pred_region
          %p413 = scmp.lt.s32.totalorder %s19, 1
          %s414 = scalar_select %p413, %s19, 1
          %s415 = smul.addr %s414, 2
          %s416 = smul.addr %s415, 8
          %s417 = scalar_lea.vmem %s3, %s416
        $region56: #{tpu_custom_call.1} parent=51 // pred_fallthru
          _
        // Predicated region
        $region57: #{tpu_custom_call.1} parent=51 // pred_check
          %p418 = pneg %p136
        $region58: #{tpu_custom_call.1} parent=51 // pred_check_branch
          %420 = sbr.rel (%p418) target = $region60
        $region59: #{tpu_custom_call.1} parent=51 // pred_region
          %p421 = scmp.lt.s32.totalorder %s19, 1
          %s422 = scalar_select %p421, %s19, 1
          %s423 = smul.addr %s422, 2
          %s424 = smul.addr %s423, 8
          %s425 = scalar_lea.vmem %s4, %s424
        $region60: #{tpu_custom_call.1} parent=51 // pred_fallthru
          _
      $region52: #{tpu_custom_call.1} parent=5 // pred_fallthru
        _
    $region6: #{tpu_custom_call.1} parent=1 // loop_footer
      %s17 = sadd.s32 1, %s13
    $region7: #{tpu_custom_call.1} parent=1 // loop_footer_branch
      %12 = sbr.rel target = $region3
    $region8: #{tpu_custom_call.1} parent=1 // loop_exit
      _
    %426 = vsyncpa [#allocation3], 1
    %s427 = scalar_lea.sflag [#allocation3], 1
    %428 = vsyncpa %s427, 1
    %429 = vsyncpa [#allocation5], 1

</llo_original>
